<compile_context>
chip_gen: v7x
topology: tpu7x:2x2x1
jax: 0.10.0
libtpu: 0.0.40
codegen_flags: <defaults>
</compile_context>

<pallas_src>
import functools

import jax
import jax.numpy as jnp
from jax import lax
from jax.experimental import pallas as pl
from jax.experimental.pallas import tpu as pltpu


# --------------------------------- kernel -----------------------------------
def _multires_kernel(img_w, mask_ref, x_ref, w1_ref, b1_ref, w2_ref, b2_ref,
                     w3_ref, b3_ref, wp_ref, bp_ref, o_ref):
    nb, cp, hw = x_ref.shape
    L = nb * hw
    mxu_dt = w1_ref.dtype

    # Hoist the 8 non-centre tap-validity rows once; (1, L) each, broadcast
    # over the cp sublanes at the multiply below.
    mask_rows = [None if t == 4 else mask_ref[pl.ds(t, 1), :] for t in range(9)]

    def conv3x3(a, w_ref, b_ref):
        """3x3 'same' conv of the (cp, L) activation as ONE im2col MXU matmul.

        The shifted taps are lane-rotations of `a` (pltpu.roll, XLU slot);
        wrapped / cross-row / cross-image lanes are zeroed by the tap mask.
        Returns a float32 (rows, L) value (rows = cp+Up or Up, selector-folded).
        """
        pieces = []
        for t in range(9):
            dh, dw = t // 3, t % 3
            k = (dh - 1) * img_w + (dw - 1)                # lane offset of tap
            shifted = a if k == 0 else pltpu.roll(a, (-k) % L, axis=1)
            if t != 4:                                     # centre: always valid
                shifted = shifted * mask_rows[t]
            pieces.append(shifted)
        patch = jnp.concatenate(pieces, axis=0)            # (9*cp, L)
        return (jnp.dot(w_ref[...], patch.astype(mxu_dt),
                        preferred_element_type=jnp.float32) + b_ref[...])

    # Flatten this block's nb images into one lane-dense (cp, L) slab
    # (lane q = n*H*W + h*W + w, channels on sublanes).
    if nb == 1:
        a0 = x_ref[0]
    else:
        a0 = jnp.concatenate([x_ref[i] for i in range(nb)], axis=1)

    # 1x1 conv on x -> running (Up, L) residual accumulator (bias folded in).
    out = (jnp.dot(wp_ref[...], a0.astype(mxu_dt),
                   preferred_element_type=jnp.float32) + bp_ref[...])

    # conv1: augmented weight -> rows [0, cp) chain into conv2, rows [cp, cp+Up)
    # are the selector-placed conv1 output added straight into `out`.
    r = conv3x3(a0, w1_ref, b1_ref)
    out = out + r[cp:, :]
    a = r[:cp, :]

    # conv2(a1): same augmented layout.
    r = conv3x3(a, w2_ref, b2_ref)
    out = out + r[cp:, :]
    a = r[:cp, :]

    # conv3(a2): selector pre-folded, the matmul directly yields (Up, L).
    out = out + conv3x3(a, w3_ref, b3_ref)

    # One full-sublane, lane-dense (Up, hw) store per image (NC(HW) layout).
    for i in range(nb):
        o_ref[i] = out[:, i * hw:(i + 1) * hw]


# ------------------------- host-side packing helpers -------------------------
def _ceil_to(x, m):
    return ((x + m - 1) // m) * m


@functools.partial(jax.jit, static_argnames=("mxu_dtype", "images_per_block"))
def multires_block(x_nchw, params, *, mxu_dtype=jnp.float32, images_per_block=1):
    """PyTorch-facing MultiResBlock forward: NCHW in, NCHW out (float32)."""
    w1, b1, w2, b2, w3, b3, wp, bp = params
    n, cin, h, wd = x_nchw.shape
    c1, c2, c3 = w1.shape[0], w2.shape[0], w3.shape[0]
    u = wp.shape[0]
    assert c1 + c2 + c3 == u, "U//6 + U//3 + U//2 must equal U (as in PyTorch)"
    hw = h * wd
    cp = _ceil_to(max(cin, c1, c2, c3), 8)   # sublane-padded channel count
    up = _ceil_to(u, 8)                      # sublane-padded output channels
    nb = images_per_block
    assert n % nb == 0, "batch must be divisible by images_per_block"
    l_blk = nb * hw

    def pack3x3(w, row_off, rows):
        """(Co,Ci,3,3) OIHW -> (rows, 9*cp), tap-major/channel-minor columns,
        real output rows placed at [row_off, row_off+Co)."""
        co, ci = w.shape[0], w.shape[1]
        wt = jnp.transpose(w, (0, 2, 3, 1)).astype(jnp.float32)   # (Co,3,3,Ci)
        wt = jnp.pad(wt, ((0, 0), (0, 0), (0, 0), (0, cp - ci)))
        wt = wt.reshape(co, 9 * cp)
        return jnp.pad(wt, ((row_off, rows - row_off - co), (0, 0)))

    def packb(b, row_off, rows):
        return jnp.pad(b.astype(jnp.float32),
                       (row_off, rows - row_off - b.shape[0])).reshape(rows, 1)

    # Selector-folded (augmented) weights: [chain rows (cp); output rows (up)].
    w1a = jnp.concatenate([pack3x3(w1, 0, cp), pack3x3(w1, 0, up)], 0).astype(mxu_dtype)
    b1a = jnp.concatenate([packb(b1, 0, cp), packb(b1, 0, up)], 0)
    w2a = jnp.concatenate([pack3x3(w2, 0, cp), pack3x3(w2, c1, up)], 0).astype(mxu_dtype)
    b2a = jnp.concatenate([packb(b2, 0, cp), packb(b2, c1, up)], 0)
    w3a = pack3x3(w3, c1 + c2, up).astype(mxu_dtype)
    b3a = packb(b3, c1 + c2, up)
    wpa = jnp.pad(wp.reshape(u, cin).astype(jnp.float32),
                  ((0, up - u), (0, cp - cin))).astype(mxu_dtype)
    bpa = packb(bp, 0, up)

    # Activations: NCHW -> (N, Cp, H*W); cheap reshape + channel pad only.
    x_flat = jnp.pad(x_nchw.astype(jnp.float32).reshape(n, cin, hw),
                     ((0, 0), (0, cp - cin), (0, 0)))

    # (9, nb*hw) tap-validity mask (channel-independent; broadcast in-kernel).
    hh = jnp.arange(h)[:, None]
    ww = jnp.arange(wd)[None, :]
    rows = []
    for dh in range(3):
        for dw in range(3):
            valid = ((hh + dh - 1 >= 0) & (hh + dh - 1 < h) &
                     (ww + dw - 1 >= 0) & (ww + dw - 1 < wd))
            rows.append(valid.reshape(hw))
    mask = jnp.tile(jnp.stack(rows).astype(jnp.float32), (1, nb))

    def const_spec(shape):
        nd = len(shape)
        return pl.BlockSpec(shape, lambda i, _nd=nd: (0,) * _nd)

    # Rough per-block working-set estimate (act/patch/mask/out); only raise the
    # scoped VMEM limit if the tiles actually need it (never for small shapes).
    est = 4 * l_blk * (13 * cp + 3 * up) + 4 * 9 * l_blk
    vmem_limit = None if est < (8 << 20) else int(min(4 * est, 48 << 20))

    y = pl.pallas_call(
        functools.partial(_multires_kernel, wd),
        out_shape=jax.ShapeDtypeStruct((n, up, hw), jnp.float32),
        grid=(n // nb,),
        in_specs=[
            const_spec(mask.shape),
            pl.BlockSpec((nb, cp, hw), lambda i: (i, 0, 0)),
            const_spec(w1a.shape), const_spec(b1a.shape),
            const_spec(w2a.shape), const_spec(b2a.shape),
            const_spec(w3a.shape), const_spec(b3a.shape),
            const_spec(wpa.shape), const_spec(bpa.shape),
        ],
        out_specs=pl.BlockSpec((nb, up, hw), lambda i: (i, 0, 0)),
        compiler_params=pltpu.CompilerParams(
            dimension_semantics=("parallel",),
            vmem_limit_bytes=vmem_limit),
    )(mask, x_flat, w1a, b1a, w2a, b2a, w3a, b3a, wpa, bpa)

    return y[:, :u, :].reshape(n, u, h, wd)


# ---------------- pure-JAX reference (for correctness check) ----------------
def _conv_ref(x, w, b):
    out = lax.conv_general_dilated(
        x, w, window_strides=(1, 1), padding="SAME",
        dimension_numbers=("NCHW", "OIHW", "NCHW"))
    return out + b.reshape(1, -1, 1, 1)


def ref_forward(x, params):
    w1, b1, w2, b2, w3, b3, wp, bp = params
    a1 = _conv_ref(x, w1, b1)
    a2 = _conv_ref(a1, w2, b2)
    a3 = _conv_ref(a2, w3, b3)
    spatial = _conv_ref(x, wp, bp)
    return spatial + jnp.concatenate([a1, a2, a3], axis=1)


if __name__ == "__main__":
    # MultiResBlock(in_channels=4, U=12) on a (2, 4, 16, 16) NCHW input.
    # (U=12 so that U//6 + U//3 + U//2 == U, which the PyTorch add requires.)
    N, Cin, H, Wd = 2, 4, 16, 16
    U = 12
    C1, C2, C3 = U // 6, U // 3, U // 2

    key = jax.random.PRNGKey(0)
    keys = jax.random.split(key, 9)
    x = jax.random.normal(keys[0], (N, Cin, H, Wd), jnp.float32)
    params = (
        0.1 * jax.random.normal(keys[1], (C1, Cin, 3, 3), jnp.float32),  # conv1 w
        0.1 * jax.random.normal(keys[2], (C1,), jnp.float32),            # conv1 b
        0.1 * jax.random.normal(keys[3], (C2, C1, 3, 3), jnp.float32),   # conv2 w
        0.1 * jax.random.normal(keys[4], (C2,), jnp.float32),            # conv2 b
        0.1 * jax.random.normal(keys[5], (C3, C2, 3, 3), jnp.float32),   # conv3 w
        0.1 * jax.random.normal(keys[6], (C3,), jnp.float32),            # conv3 b
        0.1 * jax.random.normal(keys[7], (U, Cin, 1, 1), jnp.float32),   # conv1x1 w
        0.1 * jax.random.normal(keys[8], (U,), jnp.float32),             # conv1x1 b
    )

    ref = jax.block_until_ready(ref_forward(x, params))

    # f32 MXU operands: exact-parity path (safe on all chips incl. v5e).
    out = jax.block_until_ready(multires_block(x, params))
    assert out.shape == (N, U, H, Wd), out.shape
    err = float(jnp.max(jnp.abs(out - ref)))
    assert jnp.allclose(out, ref, atol=2e-3, rtol=2e-3), f"f32 mismatch: {err}"

    # bf16 MXU operands (v6e/v7x fast path), f32 accumulation; looser check.
    out_bf16 = jax.block_until_ready(
        multires_block(x, params, mxu_dtype=jnp.bfloat16))
    err_bf16 = float(jnp.max(jnp.abs(out_bf16 - ref)))
    assert jnp.allclose(out_bf16, ref, atol=3e-2, rtol=3e-2), \
        f"bf16 mismatch: {err_bf16}"

    print("KERNEL_OK")
</pallas_src>

<mosaic_0001>
module attributes {stable_mosaic.version = 11 : i64} {
  func.func @_multires_kernel(%arg0: i32, %arg1: memref<9x256xf32, #tpu.memory_space<vmem>>, %arg2: memref<1x8x256xf32, #tpu.memory_space<vmem>>, %arg3: memref<24x72xf32, #tpu.memory_space<vmem>>, %arg4: memref<24x1xf32, #tpu.memory_space<vmem>>, %arg5: memref<24x72xf32, #tpu.memory_space<vmem>>, %arg6: memref<24x1xf32, #tpu.memory_space<vmem>>, %arg7: memref<16x72xf32, #tpu.memory_space<vmem>>, %arg8: memref<16x1xf32, #tpu.memory_space<vmem>>, %arg9: memref<16x8xf32, #tpu.memory_space<vmem>>, %arg10: memref<16x1xf32, #tpu.memory_space<vmem>>, %arg11: memref<1x16x256xf32, #tpu.memory_space<vmem>>) attributes {dimension_semantics = [#tpu.dimension_semantics<parallel>], iteration_bounds = array<i64: 2>, scalar_prefetch = 0 : i64, scratch_operands = 0 : i64, tpu.core_type = #tpu.core_type<tc>, window_params = [{pipeline_mode = #tpu.pipeline_mode<synchronous>, transform_indices = @transform_0, window_bounds = array<i64: 9, 256>}, {transform_indices = @transform_1, window_bounds = array<i64: 1, 8, 256>}, {pipeline_mode = #tpu.pipeline_mode<synchronous>, transform_indices = @transform_2, window_bounds = array<i64: 24, 72>}, {pipeline_mode = #tpu.pipeline_mode<synchronous>, transform_indices = @transform_3, window_bounds = array<i64: 24, 1>}, {pipeline_mode = #tpu.pipeline_mode<synchronous>, transform_indices = @transform_4, window_bounds = array<i64: 24, 72>}, {pipeline_mode = #tpu.pipeline_mode<synchronous>, transform_indices = @transform_5, window_bounds = array<i64: 24, 1>}, {pipeline_mode = #tpu.pipeline_mode<synchronous>, transform_indices = @transform_6, window_bounds = array<i64: 16, 72>}, {pipeline_mode = #tpu.pipeline_mode<synchronous>, transform_indices = @transform_7, window_bounds = array<i64: 16, 1>}, {pipeline_mode = #tpu.pipeline_mode<synchronous>, transform_indices = @transform_8, window_bounds = array<i64: 16, 8>}, {pipeline_mode = #tpu.pipeline_mode<synchronous>, transform_indices = @transform_9, window_bounds = array<i64: 16, 1>}, {transform_indices = @transform_10, window_bounds = array<i64: 1, 16, 256>}]} {
    %c0 = arith.constant 0 : index
    %c0_0 = arith.constant 0 : index
    %0 = vector.load %arg1[%c0, %c0_0] : memref<9x256xf32, #tpu.memory_space<vmem>>, vector<1x256xf32>
    %c1 = arith.constant 1 : index
    %c0_1 = arith.constant 0 : index
    %1 = vector.load %arg1[%c1, %c0_1] : memref<9x256xf32, #tpu.memory_space<vmem>>, vector<1x256xf32>
    %c2 = arith.constant 2 : index
    %c0_2 = arith.constant 0 : index
    %2 = vector.load %arg1[%c2, %c0_2] : memref<9x256xf32, #tpu.memory_space<vmem>>, vector<1x256xf32>
    %c3 = arith.constant 3 : index
    %c0_3 = arith.constant 0 : index
    %3 = vector.load %arg1[%c3, %c0_3] : memref<9x256xf32, #tpu.memory_space<vmem>>, vector<1x256xf32>
    %c5 = arith.constant 5 : index
    %c0_4 = arith.constant 0 : index
    %4 = vector.load %arg1[%c5, %c0_4] : memref<9x256xf32, #tpu.memory_space<vmem>>, vector<1x256xf32>
    %c6 = arith.constant 6 : index
    %c0_5 = arith.constant 0 : index
    %5 = vector.load %arg1[%c6, %c0_5] : memref<9x256xf32, #tpu.memory_space<vmem>>, vector<1x256xf32>
    %c7 = arith.constant 7 : index
    %c0_6 = arith.constant 0 : index
    %6 = vector.load %arg1[%c7, %c0_6] : memref<9x256xf32, #tpu.memory_space<vmem>>, vector<1x256xf32>
    %c8 = arith.constant 8 : index
    %c0_7 = arith.constant 0 : index
    %7 = vector.load %arg1[%c8, %c0_7] : memref<9x256xf32, #tpu.memory_space<vmem>>, vector<1x256xf32>
    %c0_8 = arith.constant 0 : index
    %c0_9 = arith.constant 0 : index
    %c0_10 = arith.constant 0 : index
    %8 = vector.load %arg2[%c0_8, %c0_9, %c0_10] : memref<1x8x256xf32, #tpu.memory_space<vmem>>, vector<1x8x256xf32>
    %9 = vector.shape_cast %8 : vector<1x8x256xf32> to vector<8x256xf32>
    %c0_11 = arith.constant 0 : index
    %c0_12 = arith.constant 0 : index
    %10 = vector.load %arg9[%c0_11, %c0_12] : memref<16x8xf32, #tpu.memory_space<vmem>>, vector<16x8xf32>
    %cst = arith.constant dense<0.000000e+00> : vector<16x256xf32>
    %11 = tpu.matmul %10, %9, %cst {dimension_numbers = #tpu.dot_dimension_numbers<[1], [0], [0], [1], [0, 0, 1, 1], [], []>} : vector<16x8xf32>, vector<8x256xf32>, vector<16x256xf32> -> vector<16x256xf32>
    %c0_13 = arith.constant 0 : index
    %c0_14 = arith.constant 0 : index
    %12 = vector.load %arg10[%c0_13, %c0_14] : memref<16x1xf32, #tpu.memory_space<vmem>>, vector<16x1xf32>
    %13 = vector.broadcast %12 : vector<16x1xf32> to vector<16x256xf32>
    %14 = arith.addf %11, %13 : vector<16x256xf32>
    %c17_i32 = arith.constant 17 : i32
    %15 = tpu.dynamic_rotate %9 by %c17_i32 dim 1 : vector<8x256xf32>, i32 -> vector<8x256xf32>
    %16 = vector.broadcast %0 : vector<1x256xf32> to vector<8x256xf32>
    %17 = arith.mulf %15, %16 : vector<8x256xf32>
    %c16_i32 = arith.constant 16 : i32
    %18 = tpu.dynamic_rotate %9 by %c16_i32 dim 1 : vector<8x256xf32>, i32 -> vector<8x256xf32>
    %19 = vector.broadcast %1 : vector<1x256xf32> to vector<8x256xf32>
    %20 = arith.mulf %18, %19 : vector<8x256xf32>
    %c15_i32 = arith.constant 15 : i32
    %21 = tpu.dynamic_rotate %9 by %c15_i32 dim 1 : vector<8x256xf32>, i32 -> vector<8x256xf32>
    %22 = vector.broadcast %2 : vector<1x256xf32> to vector<8x256xf32>
    %23 = arith.mulf %21, %22 : vector<8x256xf32>
    %c1_i32 = arith.constant 1 : i32
    %24 = tpu.dynamic_rotate %9 by %c1_i32 dim 1 : vector<8x256xf32>, i32 -> vector<8x256xf32>
    %25 = vector.broadcast %3 : vector<1x256xf32> to vector<8x256xf32>
    %26 = arith.mulf %24, %25 : vector<8x256xf32>
    %c255_i32 = arith.constant 255 : i32
    %27 = tpu.dynamic_rotate %9 by %c255_i32 dim 1 : vector<8x256xf32>, i32 -> vector<8x256xf32>
    %28 = vector.broadcast %4 : vector<1x256xf32> to vector<8x256xf32>
    %29 = arith.mulf %27, %28 : vector<8x256xf32>
    %c241_i32 = arith.constant 241 : i32
    %30 = tpu.dynamic_rotate %9 by %c241_i32 dim 1 : vector<8x256xf32>, i32 -> vector<8x256xf32>
    %31 = vector.broadcast %5 : vector<1x256xf32> to vector<8x256xf32>
    %32 = arith.mulf %30, %31 : vector<8x256xf32>
    %c240_i32 = arith.constant 240 : i32
    %33 = tpu.dynamic_rotate %9 by %c240_i32 dim 1 : vector<8x256xf32>, i32 -> vector<8x256xf32>
    %34 = vector.broadcast %6 : vector<1x256xf32> to vector<8x256xf32>
    %35 = arith.mulf %33, %34 : vector<8x256xf32>
    %c239_i32 = arith.constant 239 : i32
    %36 = tpu.dynamic_rotate %9 by %c239_i32 dim 1 : vector<8x256xf32>, i32 -> vector<8x256xf32>
    %37 = vector.broadcast %7 : vector<1x256xf32> to vector<8x256xf32>
    %38 = arith.mulf %36, %37 : vector<8x256xf32>
    %39 = tpu.concatenate %17, %20, %23, %26, %9, %29, %32, %35, %38 in 0 : vector<8x256xf32>, vector<8x256xf32>, vector<8x256xf32>, vector<8x256xf32>, vector<8x256xf32>, vector<8x256xf32>, vector<8x256xf32>, vector<8x256xf32>, vector<8x256xf32> -> vector<72x256xf32>
    %c0_15 = arith.constant 0 : index
    %c0_16 = arith.constant 0 : index
    %40 = vector.load %arg3[%c0_15, %c0_16] : memref<24x72xf32, #tpu.memory_space<vmem>>, vector<24x72xf32>
    %cst_17 = arith.constant dense<0.000000e+00> : vector<24x256xf32>
    %41 = tpu.matmul %40, %39, %cst_17 {dimension_numbers = #tpu.dot_dimension_numbers<[1], [0], [0], [1], [0, 0, 1, 1], [], []>} : vector<24x72xf32>, vector<72x256xf32>, vector<24x256xf32> -> vector<24x256xf32>
    %c0_18 = arith.constant 0 : index
    %c0_19 = arith.constant 0 : index
    %42 = vector.load %arg4[%c0_18, %c0_19] : memref<24x1xf32, #tpu.memory_space<vmem>>, vector<24x1xf32>
    %43 = vector.broadcast %42 : vector<24x1xf32> to vector<24x256xf32>
    %44 = arith.addf %41, %43 : vector<24x256xf32>
    %45 = vector.extract_strided_slice %44 {offsets = [8, 0], sizes = [16, 256], strides = [1, 1]} : vector<24x256xf32> to vector<16x256xf32>
    %46 = arith.addf %14, %45 : vector<16x256xf32>
    %47 = vector.extract_strided_slice %44 {offsets = [0, 0], sizes = [8, 256], strides = [1, 1]} : vector<24x256xf32> to vector<8x256xf32>
    %c17_i32_20 = arith.constant 17 : i32
    %48 = tpu.dynamic_rotate %47 by %c17_i32_20 dim 1 : vector<8x256xf32>, i32 -> vector<8x256xf32>
    %49 = vector.broadcast %0 : vector<1x256xf32> to vector<8x256xf32>
    %50 = arith.mulf %48, %49 : vector<8x256xf32>
    %c16_i32_21 = arith.constant 16 : i32
    %51 = tpu.dynamic_rotate %47 by %c16_i32_21 dim 1 : vector<8x256xf32>, i32 -> vector<8x256xf32>
    %52 = vector.broadcast %1 : vector<1x256xf32> to vector<8x256xf32>
    %53 = arith.mulf %51, %52 : vector<8x256xf32>
    %c15_i32_22 = arith.constant 15 : i32
    %54 = tpu.dynamic_rotate %47 by %c15_i32_22 dim 1 : vector<8x256xf32>, i32 -> vector<8x256xf32>
    %55 = vector.broadcast %2 : vector<1x256xf32> to vector<8x256xf32>
    %56 = arith.mulf %54, %55 : vector<8x256xf32>
    %c1_i32_23 = arith.constant 1 : i32
    %57 = tpu.dynamic_rotate %47 by %c1_i32_23 dim 1 : vector<8x256xf32>, i32 -> vector<8x256xf32>
    %58 = vector.broadcast %3 : vector<1x256xf32> to vector<8x256xf32>
    %59 = arith.mulf %57, %58 : vector<8x256xf32>
    %c255_i32_24 = arith.constant 255 : i32
    %60 = tpu.dynamic_rotate %47 by %c255_i32_24 dim 1 : vector<8x256xf32>, i32 -> vector<8x256xf32>
    %61 = vector.broadcast %4 : vector<1x256xf32> to vector<8x256xf32>
    %62 = arith.mulf %60, %61 : vector<8x256xf32>
    %c241_i32_25 = arith.constant 241 : i32
    %63 = tpu.dynamic_rotate %47 by %c241_i32_25 dim 1 : vector<8x256xf32>, i32 -> vector<8x256xf32>
    %64 = vector.broadcast %5 : vector<1x256xf32> to vector<8x256xf32>
    %65 = arith.mulf %63, %64 : vector<8x256xf32>
    %c240_i32_26 = arith.constant 240 : i32
    %66 = tpu.dynamic_rotate %47 by %c240_i32_26 dim 1 : vector<8x256xf32>, i32 -> vector<8x256xf32>
    %67 = vector.broadcast %6 : vector<1x256xf32> to vector<8x256xf32>
    %68 = arith.mulf %66, %67 : vector<8x256xf32>
    %c239_i32_27 = arith.constant 239 : i32
    %69 = tpu.dynamic_rotate %47 by %c239_i32_27 dim 1 : vector<8x256xf32>, i32 -> vector<8x256xf32>
    %70 = vector.broadcast %7 : vector<1x256xf32> to vector<8x256xf32>
    %71 = arith.mulf %69, %70 : vector<8x256xf32>
    %72 = tpu.concatenate %50, %53, %56, %59, %47, %62, %65, %68, %71 in 0 : vector<8x256xf32>, vector<8x256xf32>, vector<8x256xf32>, vector<8x256xf32>, vector<8x256xf32>, vector<8x256xf32>, vector<8x256xf32>, vector<8x256xf32>, vector<8x256xf32> -> vector<72x256xf32>
    %c0_28 = arith.constant 0 : index
    %c0_29 = arith.constant 0 : index
    %73 = vector.load %arg5[%c0_28, %c0_29] : memref<24x72xf32, #tpu.memory_space<vmem>>, vector<24x72xf32>
    %cst_30 = arith.constant dense<0.000000e+00> : vector<24x256xf32>
    %74 = tpu.matmul %73, %72, %cst_30 {dimension_numbers = #tpu.dot_dimension_numbers<[1], [0], [0], [1], [0, 0, 1, 1], [], []>} : vector<24x72xf32>, vector<72x256xf32>, vector<24x256xf32> -> vector<24x256xf32>
    %c0_31 = arith.constant 0 : index
    %c0_32 = arith.constant 0 : index
    %75 = vector.load %arg6[%c0_31, %c0_32] : memref<24x1xf32, #tpu.memory_space<vmem>>, vector<24x1xf32>
    %76 = vector.broadcast %75 : vector<24x1xf32> to vector<24x256xf32>
    %77 = arith.addf %74, %76 : vector<24x256xf32>
    %78 = vector.extract_strided_slice %77 {offsets = [8, 0], sizes = [16, 256], strides = [1, 1]} : vector<24x256xf32> to vector<16x256xf32>
    %79 = arith.addf %46, %78 : vector<16x256xf32>
    %80 = vector.extract_strided_slice %77 {offsets = [0, 0], sizes = [8, 256], strides = [1, 1]} : vector<24x256xf32> to vector<8x256xf32>
    %c17_i32_33 = arith.constant 17 : i32
    %81 = tpu.dynamic_rotate %80 by %c17_i32_33 dim 1 : vector<8x256xf32>, i32 -> vector<8x256xf32>
    %82 = vector.broadcast %0 : vector<1x256xf32> to vector<8x256xf32>
    %83 = arith.mulf %81, %82 : vector<8x256xf32>
    %c16_i32_34 = arith.constant 16 : i32
    %84 = tpu.dynamic_rotate %80 by %c16_i32_34 dim 1 : vector<8x256xf32>, i32 -> vector<8x256xf32>
    %85 = vector.broadcast %1 : vector<1x256xf32> to vector<8x256xf32>
    %86 = arith.mulf %84, %85 : vector<8x256xf32>
    %c15_i32_35 = arith.constant 15 : i32
    %87 = tpu.dynamic_rotate %80 by %c15_i32_35 dim 1 : vector<8x256xf32>, i32 -> vector<8x256xf32>
    %88 = vector.broadcast %2 : vector<1x256xf32> to vector<8x256xf32>
    %89 = arith.mulf %87, %88 : vector<8x256xf32>
    %c1_i32_36 = arith.constant 1 : i32
    %90 = tpu.dynamic_rotate %80 by %c1_i32_36 dim 1 : vector<8x256xf32>, i32 -> vector<8x256xf32>
    %91 = vector.broadcast %3 : vector<1x256xf32> to vector<8x256xf32>
    %92 = arith.mulf %90, %91 : vector<8x256xf32>
    %c255_i32_37 = arith.constant 255 : i32
    %93 = tpu.dynamic_rotate %80 by %c255_i32_37 dim 1 : vector<8x256xf32>, i32 -> vector<8x256xf32>
    %94 = vector.broadcast %4 : vector<1x256xf32> to vector<8x256xf32>
    %95 = arith.mulf %93, %94 : vector<8x256xf32>
    %c241_i32_38 = arith.constant 241 : i32
    %96 = tpu.dynamic_rotate %80 by %c241_i32_38 dim 1 : vector<8x256xf32>, i32 -> vector<8x256xf32>
    %97 = vector.broadcast %5 : vector<1x256xf32> to vector<8x256xf32>
    %98 = arith.mulf %96, %97 : vector<8x256xf32>
    %c240_i32_39 = arith.constant 240 : i32
    %99 = tpu.dynamic_rotate %80 by %c240_i32_39 dim 1 : vector<8x256xf32>, i32 -> vector<8x256xf32>
    %100 = vector.broadcast %6 : vector<1x256xf32> to vector<8x256xf32>
    %101 = arith.mulf %99, %100 : vector<8x256xf32>
    %c239_i32_40 = arith.constant 239 : i32
    %102 = tpu.dynamic_rotate %80 by %c239_i32_40 dim 1 : vector<8x256xf32>, i32 -> vector<8x256xf32>
    %103 = vector.broadcast %7 : vector<1x256xf32> to vector<8x256xf32>
    %104 = arith.mulf %102, %103 : vector<8x256xf32>
    %105 = tpu.concatenate %83, %86, %89, %92, %80, %95, %98, %101, %104 in 0 : vector<8x256xf32>, vector<8x256xf32>, vector<8x256xf32>, vector<8x256xf32>, vector<8x256xf32>, vector<8x256xf32>, vector<8x256xf32>, vector<8x256xf32>, vector<8x256xf32> -> vector<72x256xf32>
    %c0_41 = arith.constant 0 : index
    %c0_42 = arith.constant 0 : index
    %106 = vector.load %arg7[%c0_41, %c0_42] : memref<16x72xf32, #tpu.memory_space<vmem>>, vector<16x72xf32>
    %cst_43 = arith.constant dense<0.000000e+00> : vector<16x256xf32>
    %107 = tpu.matmul %106, %105, %cst_43 {dimension_numbers = #tpu.dot_dimension_numbers<[1], [0], [0], [1], [0, 0, 1, 1], [], []>} : vector<16x72xf32>, vector<72x256xf32>, vector<16x256xf32> -> vector<16x256xf32>
    %c0_44 = arith.constant 0 : index
    %c0_45 = arith.constant 0 : index
    %108 = vector.load %arg8[%c0_44, %c0_45] : memref<16x1xf32, #tpu.memory_space<vmem>>, vector<16x1xf32>
    %109 = vector.broadcast %108 : vector<16x1xf32> to vector<16x256xf32>
    %110 = arith.addf %107, %109 : vector<16x256xf32>
    %111 = arith.addf %79, %110 : vector<16x256xf32>
    %c0_46 = arith.constant 0 : index
    %c0_47 = arith.constant 0 : index
    %c0_48 = arith.constant 0 : index
    %112 = vector.load %arg11[%c0_46, %c0_47, %c0_48] : memref<1x16x256xf32, #tpu.memory_space<vmem>>, vector<1x16x256xf32>
    %113 = vector.shape_cast %112 : vector<1x16x256xf32> to vector<16x256xf32>
    %114 = vector.shape_cast %111 : vector<16x256xf32> to vector<1x16x256xf32>
    tpu.vector_store %arg11[%c0_46, %c0_47, %c0_48], %114 {strides = array<i32>} : memref<1x16x256xf32, #tpu.memory_space<vmem>>, vector<1x16x256xf32>,
    return
  }
  func.func @transform_0(%arg0: i32) -> (i32, i32) {
    %c0_i32 = arith.constant 0 : i32
    %c0_i32_0 = arith.constant 0 : i32
    %c0_i32_1 = arith.constant 0 : i32
    return %c0_i32, %c0_i32_0 : i32, i32
  }
  func.func @transform_1(%arg0: i32) -> (i32, i32, i32) {
    %c0_i32 = arith.constant 0 : i32
    %c0_i32_0 = arith.constant 0 : i32
    %c0_i32_1 = arith.constant 0 : i32
    return %arg0, %c0_i32, %c0_i32_0 : i32, i32, i32
  }
  func.func @transform_2(%arg0: i32) -> (i32, i32) {
    %c0_i32 = arith.constant 0 : i32
    %c0_i32_0 = arith.constant 0 : i32
    %c0_i32_1 = arith.constant 0 : i32
    return %c0_i32, %c0_i32_0 : i32, i32
  }
  func.func @transform_3(%arg0: i32) -> (i32, i32) {
    %c0_i32 = arith.constant 0 : i32
    %c0_i32_0 = arith.constant 0 : i32
    %c0_i32_1 = arith.constant 0 : i32
    return %c0_i32, %c0_i32_0 : i32, i32
  }
  func.func @transform_4(%arg0: i32) -> (i32, i32) {
    %c0_i32 = arith.constant 0 : i32
    %c0_i32_0 = arith.constant 0 : i32
    %c0_i32_1 = arith.constant 0 : i32
    return %c0_i32, %c0_i32_0 : i32, i32
  }
  func.func @transform_5(%arg0: i32) -> (i32, i32) {
    %c0_i32 = arith.constant 0 : i32
    %c0_i32_0 = arith.constant 0 : i32
    %c0_i32_1 = arith.constant 0 : i32
    return %c0_i32, %c0_i32_0 : i32, i32
  }
  func.func @transform_6(%arg0: i32) -> (i32, i32) {
    %c0_i32 = arith.constant 0 : i32
    %c0_i32_0 = arith.constant 0 : i32
    %c0_i32_1 = arith.constant 0 : i32
    return %c0_i32, %c0_i32_0 : i32, i32
  }
  func.func @transform_7(%arg0: i32) -> (i32, i32) {
    %c0_i32 = arith.constant 0 : i32
    %c0_i32_0 = arith.constant 0 : i32
    %c0_i32_1 = arith.constant 0 : i32
    return %c0_i32, %c0_i32_0 : i32, i32
  }
  func.func @transform_8(%arg0: i32) -> (i32, i32) {
    %c0_i32 = arith.constant 0 : i32
    %c0_i32_0 = arith.constant 0 : i32
    %c0_i32_1 = arith.constant 0 : i32
    return %c0_i32, %c0_i32_0 : i32, i32
  }
  func.func @transform_9(%arg0: i32) -> (i32, i32) {
    %c0_i32 = arith.constant 0 : i32
    %c0_i32_0 = arith.constant 0 : i32
    %c0_i32_1 = arith.constant 0 : i32
    return %c0_i32, %c0_i32_0 : i32, i32
  }
  func.func @transform_10(%arg0: i32) -> (i32, i32, i32) {
    %c0_i32 = arith.constant 0 : i32
    %c0_i32_0 = arith.constant 0 : i32
    %c0_i32_1 = arith.constant 0 : i32
    return %arg0, %c0_i32, %c0_i32_0 : i32, i32, i32
  }
}

</mosaic_0001>

<llo_original>
// kernel: multires_block.1
$region0: #{multires_block.1}
  #allocation0 [shape = 'u32[]', space=smem, size = 0x4, offset = 0x4, fixed_abs, tag = 'smem constant byte address 0x4 - core index']
  #allocation1 [shape = 'u32[144,128]{1,0:T(1,128)}', space=vmem, size = 0x12000, scoped, tag = 'internal scratch']
  %s0 = inlined_call_operand.vmem [shape: f32[9,256], index: 0, kind: input, shape index: {}]
  %s1 = inlined_call_operand.vmem [shape: f32[2,8,256], index: 1, kind: input, shape index: {}]
  %s2 = inlined_call_operand.vmem [shape: f32[24,72], index: 2, kind: input, shape index: {}]
  %s3 = inlined_call_operand.vmem [shape: f32[24,1], index: 3, kind: input, shape index: {}]
  %s4 = inlined_call_operand.vmem [shape: f32[24,72], index: 4, kind: input, shape index: {}]
  %s5 = inlined_call_operand.vmem [shape: f32[24,1], index: 5, kind: input, shape index: {}]
  %s6 = inlined_call_operand.vmem [shape: f32[16,72], index: 6, kind: input, shape index: {}]
  %s7 = inlined_call_operand.vmem [shape: f32[16,1], index: 7, kind: input, shape index: {}]
  %s8 = inlined_call_operand.vmem [shape: f32[16,8], index: 8, kind: input, shape index: {}]
  %s9 = inlined_call_operand.vmem [shape: f32[16,1], index: 9, kind: input, shape index: {}]
  %s10 = inlined_call_operand.vmem [shape: f32[2,16,256], index: 10, kind: output, shape index: {}]
  %s11 = sld [smem:[#allocation0]]
  $region73: #{multires_block.1} parent=0
    _
  %s13 = ssub.s32 1, %s11
  %s14 = scalar_select 0, %s13, %s11
  loop: start=0, step=1, limit=4
  $region2: #{multires_block.1} parent=0 // loop_pre_header
    _
  $region3: #{multires_block.1} parent=0 // loop_header
    %s16 = sphi 0, %s20
    %p17 = scmp.ge.s32.totalorder %s16, 4
    %s24 = sphi 0, %s24
    %s26 = sphi 0, %s24
    %s27 = sphi 0, %s26
    %s41 = sphi 0, %s27
    %s47 = sphi 0, %s49
    %s50 = sphi 0, %s47
    %s51 = sphi 0, %s50
    %s67 = sphi 0, %s51
    %s71 = sphi 0, %s71
    %s73 = sphi 0, %s71
    %s74 = sphi 0, %s73
    %s88 = sphi 0, %s74
    %s92 = sphi 0, %s92
    %s94 = sphi 0, %s92
    %s95 = sphi 0, %s94
    %s109 = sphi 0, %s95
    %s113 = sphi 0, %s113
    %s115 = sphi 0, %s113
    %s116 = sphi 0, %s115
    %s130 = sphi 0, %s116
    %s134 = sphi 0, %s134
    %s136 = sphi 0, %s134
    %s137 = sphi 0, %s136
    %s151 = sphi 0, %s137
    %s155 = sphi 0, %s155
    %s157 = sphi 0, %s155
    %s158 = sphi 0, %s157
    %s172 = sphi 0, %s158
    %s176 = sphi 0, %s176
    %s178 = sphi 0, %s176
    %s179 = sphi 0, %s178
    %s193 = sphi 0, %s179
    %s197 = sphi 0, %s197
    %s199 = sphi 0, %s197
    %s200 = sphi 0, %s199
    %s214 = sphi 0, %s200
    %s218 = sphi 0, %s218
    %s220 = sphi 0, %s218
    %s221 = sphi 0, %s220
    %s235 = sphi 0, %s221
    %s241 = sphi 0, %s243
    %s244 = sphi 0, %s241
    %s245 = sphi 0, %s244
    %s261 = sphi 0, %s245
  $region4: #{multires_block.1} parent=0 // loop_header_branch
    %19 = sbr.rel (%p17) target = $region8
  $region5: #{multires_block.1} parent=0 // loop_body
    %s21 = ssub.s32 %s16, 1
    %s22 = ssub.s32 %s16, 2
    %s23 = sadd.s32 %s16, 1
    %s25 = sadd.s32 %s24, 1
    %p28 = scmp.eq.s32.totalorder %s16, 1
    %p29 = scmp.ne.s32.totalorder %s24, %s26
    %p30 = scmp.eq.s32.totalorder %s16, 0
    %p31 = por %p29, %p30
    %p32 = scmp.ne.s32.totalorder %s24, %s26
    %p33 = scmp.eq.s32.totalorder %s21, 1
    %p34 = por %p32, %p33
    %p35 = scmp.ne.s32.totalorder %s26, %s27
    %p36 = scmp.eq.s32.totalorder %s21, 0
    %p37 = por %p35, %p36
    %p38 = scmp.ne.s32.totalorder %s26, %s27
    %p39 = scmp.eq.s32.totalorder %s22, 1
    %p40 = por %p38, %p39
    %p42 = scmp.ne.s32.totalorder %s27, %s41
    %p43 = scmp.eq.s32.totalorder %s22, 0
    %p44 = por %p42, %p43
    %s45 = ssub.s32 %s16, %s23
    %p46 = scmp.eq.s32.totalorder %s45, 0
    %s48 = sadd.s32 %s47, 1
    %s49 = scalar_select %p46, %s47, %s48
    %p52 = pneg %p46
    %p53 = scmp.eq.s32.totalorder %s16, 1
    %p54 = por %p52, %p53
    %p55 = scmp.ne.s32.totalorder %s47, %s50
    %p56 = scmp.eq.s32.totalorder %s16, 0
    %p57 = por %p55, %p56
    %p58 = scmp.ne.s32.totalorder %s47, %s50
    %p59 = scmp.eq.s32.totalorder %s21, 1
    %p60 = por %p58, %p59
    %p61 = scmp.ne.s32.totalorder %s50, %s51
    %p62 = scmp.eq.s32.totalorder %s21, 0
    %p63 = por %p61, %p62
    %p64 = scmp.ne.s32.totalorder %s50, %s51
    %p65 = scmp.eq.s32.totalorder %s22, 1
    %p66 = por %p64, %p65
    %p68 = scmp.ne.s32.totalorder %s51, %s67
    %p69 = scmp.eq.s32.totalorder %s22, 0
    %p70 = por %p68, %p69
    %s72 = sadd.s32 %s71, 1
    %p75 = scmp.eq.s32.totalorder %s16, 1
    %p76 = scmp.ne.s32.totalorder %s71, %s73
    %p77 = scmp.eq.s32.totalorder %s16, 0
    %p78 = por %p76, %p77
    %p79 = scmp.ne.s32.totalorder %s71, %s73
    %p80 = scmp.eq.s32.totalorder %s21, 1
    %p81 = por %p79, %p80
    %p82 = scmp.ne.s32.totalorder %s73, %s74
    %p83 = scmp.eq.s32.totalorder %s21, 0
    %p84 = por %p82, %p83
    %p85 = scmp.ne.s32.totalorder %s73, %s74
    %p86 = scmp.eq.s32.totalorder %s22, 1
    %p87 = por %p85, %p86
    %p89 = scmp.ne.s32.totalorder %s74, %s88
    %p90 = scmp.eq.s32.totalorder %s22, 0
    %p91 = por %p89, %p90
    %s93 = sadd.s32 %s92, 1
    %p96 = scmp.eq.s32.totalorder %s16, 1
    %p97 = scmp.ne.s32.totalorder %s92, %s94
    %p98 = scmp.eq.s32.totalorder %s16, 0
    %p99 = por %p97, %p98
    %p100 = scmp.ne.s32.totalorder %s92, %s94
    %p101 = scmp.eq.s32.totalorder %s21, 1
    %p102 = por %p100, %p101
    %p103 = scmp.ne.s32.totalorder %s94, %s95
    %p104 = scmp.eq.s32.totalorder %s21, 0
    %p105 = por %p103, %p104
    %p106 = scmp.ne.s32.totalorder %s94, %s95
    %p107 = scmp.eq.s32.totalorder %s22, 1
    %p108 = por %p106, %p107
    %p110 = scmp.ne.s32.totalorder %s95, %s109
    %p111 = scmp.eq.s32.totalorder %s22, 0
    %p112 = por %p110, %p111
    %s114 = sadd.s32 %s113, 1
    %p117 = scmp.eq.s32.totalorder %s16, 1
    %p118 = scmp.ne.s32.totalorder %s113, %s115
    %p119 = scmp.eq.s32.totalorder %s16, 0
    %p120 = por %p118, %p119
    %p121 = scmp.ne.s32.totalorder %s113, %s115
    %p122 = scmp.eq.s32.totalorder %s21, 1
    %p123 = por %p121, %p122
    %p124 = scmp.ne.s32.totalorder %s115, %s116
    %p125 = scmp.eq.s32.totalorder %s21, 0
    %p126 = por %p124, %p125
    %p127 = scmp.ne.s32.totalorder %s115, %s116
    %p128 = scmp.eq.s32.totalorder %s22, 1
    %p129 = por %p127, %p128
    %p131 = scmp.ne.s32.totalorder %s116, %s130
    %p132 = scmp.eq.s32.totalorder %s22, 0
    %p133 = por %p131, %p132
    %s135 = sadd.s32 %s134, 1
    %p138 = scmp.eq.s32.totalorder %s16, 1
    %p139 = scmp.ne.s32.totalorder %s134, %s136
    %p140 = scmp.eq.s32.totalorder %s16, 0
    %p141 = por %p139, %p140
    %p142 = scmp.ne.s32.totalorder %s134, %s136
    %p143 = scmp.eq.s32.totalorder %s21, 1
    %p144 = por %p142, %p143
    %p145 = scmp.ne.s32.totalorder %s136, %s137
    %p146 = scmp.eq.s32.totalorder %s21, 0
    %p147 = por %p145, %p146
    %p148 = scmp.ne.s32.totalorder %s136, %s137
    %p149 = scmp.eq.s32.totalorder %s22, 1
    %p150 = por %p148, %p149
    %p152 = scmp.ne.s32.totalorder %s137, %s151
    %p153 = scmp.eq.s32.totalorder %s22, 0
    %p154 = por %p152, %p153
    %s156 = sadd.s32 %s155, 1
    %p159 = scmp.eq.s32.totalorder %s16, 1
    %p160 = scmp.ne.s32.totalorder %s155, %s157
    %p161 = scmp.eq.s32.totalorder %s16, 0
    %p162 = por %p160, %p161
    %p163 = scmp.ne.s32.totalorder %s155, %s157
    %p164 = scmp.eq.s32.totalorder %s21, 1
    %p165 = por %p163, %p164
    %p166 = scmp.ne.s32.totalorder %s157, %s158
    %p167 = scmp.eq.s32.totalorder %s21, 0
    %p168 = por %p166, %p167
    %p169 = scmp.ne.s32.totalorder %s157, %s158
    %p170 = scmp.eq.s32.totalorder %s22, 1
    %p171 = por %p169, %p170
    %p173 = scmp.ne.s32.totalorder %s158, %s172
    %p174 = scmp.eq.s32.totalorder %s22, 0
    %p175 = por %p173, %p174
    %s177 = sadd.s32 %s176, 1
    %p180 = scmp.eq.s32.totalorder %s16, 1
    %p181 = scmp.ne.s32.totalorder %s176, %s178
    %p182 = scmp.eq.s32.totalorder %s16, 0
    %p183 = por %p181, %p182
    %p184 = scmp.ne.s32.totalorder %s176, %s178
    %p185 = scmp.eq.s32.totalorder %s21, 1
    %p186 = por %p184, %p185
    %p187 = scmp.ne.s32.totalorder %s178, %s179
    %p188 = scmp.eq.s32.totalorder %s21, 0
    %p189 = por %p187, %p188
    %p190 = scmp.ne.s32.totalorder %s178, %s179
    %p191 = scmp.eq.s32.totalorder %s22, 1
    %p192 = por %p190, %p191
    %p194 = scmp.ne.s32.totalorder %s179, %s193
    %p195 = scmp.eq.s32.totalorder %s22, 0
    %p196 = por %p194, %p195
    %s198 = sadd.s32 %s197, 1
    %p201 = scmp.eq.s32.totalorder %s16, 1
    %p202 = scmp.ne.s32.totalorder %s197, %s199
    %p203 = scmp.eq.s32.totalorder %s16, 0
    %p204 = por %p202, %p203
    %p205 = scmp.ne.s32.totalorder %s197, %s199
    %p206 = scmp.eq.s32.totalorder %s21, 1
    %p207 = por %p205, %p206
    %p208 = scmp.ne.s32.totalorder %s199, %s200
    %p209 = scmp.eq.s32.totalorder %s21, 0
    %p210 = por %p208, %p209
    %p211 = scmp.ne.s32.totalorder %s199, %s200
    %p212 = scmp.eq.s32.totalorder %s22, 1
    %p213 = por %p211, %p212
    %p215 = scmp.ne.s32.totalorder %s200, %s214
    %p216 = scmp.eq.s32.totalorder %s22, 0
    %p217 = por %p215, %p216
    %s219 = sadd.s32 %s218, 1
    %p222 = scmp.eq.s32.totalorder %s16, 1
    %p223 = scmp.ne.s32.totalorder %s218, %s220
    %p224 = scmp.eq.s32.totalorder %s16, 0
    %p225 = por %p223, %p224
    %p226 = scmp.ne.s32.totalorder %s218, %s220
    %p227 = scmp.eq.s32.totalorder %s21, 1
    %p228 = por %p226, %p227
    %p229 = scmp.ne.s32.totalorder %s220, %s221
    %p230 = scmp.eq.s32.totalorder %s21, 0
    %p231 = por %p229, %p230
    %p232 = scmp.ne.s32.totalorder %s220, %s221
    %p233 = scmp.eq.s32.totalorder %s22, 1
    %p234 = por %p232, %p233
    %p236 = scmp.ne.s32.totalorder %s221, %s235
    %p237 = scmp.eq.s32.totalorder %s22, 0
    %p238 = por %p236, %p237
    %s239 = ssub.s32 %s16, %s23
    %p240 = scmp.eq.s32.totalorder %s239, 0
    %s242 = sadd.s32 %s241, 1
    %s243 = scalar_select %p240, %s241, %s242
    %p246 = pneg %p240
    %p247 = scmp.eq.s32.totalorder %s16, 1
    %p248 = por %p246, %p247
    %p249 = scmp.ne.s32.totalorder %s241, %s244
    %p250 = scmp.eq.s32.totalorder %s16, 0
    %p251 = por %p249, %p250
    %p252 = scmp.ne.s32.totalorder %s241, %s244
    %p253 = scmp.eq.s32.totalorder %s21, 1
    %p254 = por %p252, %p253
    %p255 = scmp.ne.s32.totalorder %s244, %s245
    %p256 = scmp.eq.s32.totalorder %s21, 0
    %p257 = por %p255, %p256
    %p258 = scmp.ne.s32.totalorder %s244, %s245
    %p259 = scmp.eq.s32.totalorder %s22, 1
    %p260 = por %p258, %p259
    %p262 = scmp.ne.s32.totalorder %s245, %s261
    %p263 = scmp.eq.s32.totalorder %s22, 0
    %p264 = por %p262, %p263
    %p265 = scmp.le.s32.totalorder 1, %s16
    %p266 = scmp.lt.s32.totalorder %s16, 3
    %p267 = pnand %p265, %p266
    %p268 = pneg %p267
    // Predicated region
    $region9: #{multires_block.1} parent=5 // pred_check
      _
    $region10: #{multires_block.1} parent=5 // pred_check_branch
      %270 = sbr.rel (%p267) target = $region12
    $region11: #{multires_block.1} parent=5 // pred_region
      %s271 = ssub.s32 %s16, 1
      // Predicated region
      $region13: #{multires_block.1} parent=11 // pred_check
        %p272 = pneg %p37
      $region14: #{multires_block.1} parent=11 // pred_check_branch
        %274 = sbr.rel (%p272) target = $region16
      $region15: #{multires_block.1} parent=11 // pred_region
        _
      $region16: #{multires_block.1} parent=11 // pred_fallthru
        _
      // Predicated region
      $region17: #{multires_block.1} parent=11 // pred_check
        %p275 = pneg %p84
      $region18: #{multires_block.1} parent=11 // pred_check_branch
        %277 = sbr.rel (%p275) target = $region20
      $region19: #{multires_block.1} parent=11 // pred_region
        _
      $region20: #{multires_block.1} parent=11 // pred_fallthru
        _
      // Predicated region
      $region21: #{multires_block.1} parent=11 // pred_check
        %p278 = pneg %p105
      $region22: #{multires_block.1} parent=11 // pred_check_branch
        %280 = sbr.rel (%p278) target = $region24
      $region23: #{multires_block.1} parent=11 // pred_region
        _
      $region24: #{multires_block.1} parent=11 // pred_fallthru
        _
      // Predicated region
      $region25: #{multires_block.1} parent=11 // pred_check
        %p281 = pneg %p126
      $region26: #{multires_block.1} parent=11 // pred_check_branch
        %283 = sbr.rel (%p281) target = $region28
      $region27: #{multires_block.1} parent=11 // pred_region
        _
      $region28: #{multires_block.1} parent=11 // pred_fallthru
        _
      // Predicated region
      $region29: #{multires_block.1} parent=11 // pred_check
        %p284 = pneg %p147
      $region30: #{multires_block.1} parent=11 // pred_check_branch
        %286 = sbr.rel (%p284) target = $region32
      $region31: #{multires_block.1} parent=11 // pred_region
        _
      $region32: #{multires_block.1} parent=11 // pred_fallthru
        _
      // Predicated region
      $region33: #{multires_block.1} parent=11 // pred_check
        %p287 = pneg %p168
      $region34: #{multires_block.1} parent=11 // pred_check_branch
        %289 = sbr.rel (%p287) target = $region36
      $region35: #{multires_block.1} parent=11 // pred_region
        _
      $region36: #{multires_block.1} parent=11 // pred_fallthru
        _
      // Predicated region
      $region37: #{multires_block.1} parent=11 // pred_check
        %p290 = pneg %p189
      $region38: #{multires_block.1} parent=11 // pred_check_branch
        %292 = sbr.rel (%p290) target = $region40
      $region39: #{multires_block.1} parent=11 // pred_region
        _
      $region40: #{multires_block.1} parent=11 // pred_fallthru
        _
      // Predicated region
      $region41: #{multires_block.1} parent=11 // pred_check
        %p293 = pneg %p210
      $region42: #{multires_block.1} parent=11 // pred_check_branch
        %295 = sbr.rel (%p293) target = $region44
      $region43: #{multires_block.1} parent=11 // pred_region
        _
      $region44: #{multires_block.1} parent=11 // pred_fallthru
        _
      // Predicated region
      $region45: #{multires_block.1} parent=11 // pred_check
        %p296 = pneg %p231
      $region46: #{multires_block.1} parent=11 // pred_check_branch
        %298 = sbr.rel (%p296) target = $region48
      $region47: #{multires_block.1} parent=11 // pred_region
        _
      $region48: #{multires_block.1} parent=11 // pred_fallthru
        _
    $region12: #{multires_block.1} parent=5 // pred_fallthru
      _
    %p299 = scmp.lt.s32.totalorder %s16, 2
    // Predicated region
    $region49: #{multires_block.1} parent=5 // pred_check
      %p300 = pneg %p299
    $region50: #{multires_block.1} parent=5 // pred_check_branch
      %302 = sbr.rel (%p300) target = $region52
    $region51: #{multires_block.1} parent=5 // pred_region
      // Predicated region
      $region53: #{multires_block.1} parent=51 // pred_check
        %p303 = pneg %p57
      $region54: #{multires_block.1} parent=51 // pred_check_branch
        %305 = sbr.rel (%p303) target = $region56
      $region55: #{multires_block.1} parent=51 // pred_region
        %p306 = scmp.lt.s32.totalorder %s16, 1
        %s307 = scalar_select %p306, %s16, 1
        %s308 = smul.addr %s307, 2
        %s309 = smul.addr %s308, 8
        %s310 = scalar_lea.vmem %s1, %s309
      $region56: #{multires_block.1} parent=51 // pred_fallthru
        _
    $region52: #{multires_block.1} parent=5 // pred_fallthru
      _
    %p311 = scmp.le.s32.totalorder 1, %s16
    %p312 = scmp.lt.s32.totalorder %s16, 3
    %p313 = pnand %p311, %p312
    %p314 = pneg %p313
    // Predicated region
    $region57: #{multires_block.1} parent=5 // pred_check
      _
    $region58: #{multires_block.1} parent=5 // pred_check_branch
      %316 = sbr.rel (%p313) target = $region60
    $region59: #{multires_block.1} parent=5 // pred_region
      %s317 = ssub.s32 %s16, 1
      %p318 = pneg %p37
      %p319 = pneg %p34
      %p320 = scmp.lt.s32.totalorder %s21, 1
      %s321 = scalar_select %p320, %s21, 1
      %s322 = smul.addr %s321, 2
      %s323 = smul.addr %s322, 8
      %s324 = scalar_lea.vmem %s1, %s323
      %p325 = pneg %p63
      %p326 = pneg %p60
      %p327 = pneg %p84
      %p328 = pneg %p81
      %p329 = pneg %p105
      %p330 = pneg %p102
      %p331 = pneg %p126
      %p332 = pneg %p123
      %p333 = pneg %p147
      %p334 = pneg %p144
      %p335 = pneg %p168
      %p336 = pneg %p165
      %p337 = pneg %p189
      %p338 = pneg %p186
      %p339 = pneg %p210
      %p340 = pneg %p207
      %p341 = pneg %p231
      %p342 = pneg %p228
      %p343 = pneg %p257
      %p344 = pneg %p254
      %p345 = scmp.lt.s32.totalorder %s21, 1
      %s346 = scalar_select %p345, %s21, 1
      %s347 = smul.addr %s346, 4
      %s348 = smul.addr %s347, 8
      %s349 = scalar_lea.vmem %s10, %s348
      %p350 = scmp.lt.s32.totalorder %s21, 1
      %s351 = scalar_select %p350, %s21, 1
      %s352 = smul.addr %s351, 2
      %s353 = smul.addr %s352, 8
      %s354 = scalar_lea.vmem %s1, %s353
      %p355 = scmp.lt.s32.totalorder %s21, 1
      %s356 = scalar_select %p355, %s21, 1
      %s357 = smul.addr %s356, 4
      %s358 = smul.addr %s357, 8
      %s359 = scalar_lea.vmem %s10, %s358
      %v360 = vld [vmem:[%s0] ss:$8 sm:$0x3]
      %s361 = scalar_lea.vmem %s0, 1
      %v362 = vld [vmem:[%s361] ss:$8 sm:$0x3]
      %s363 = scalar_lea.vmem %s0, 2
      %v364 = vld [vmem:[%s363] ss:$8 sm:$0x3]
      %s365 = scalar_lea.vmem %s0, 3
      %v366 = vld [vmem:[%s365] ss:$8 sm:$0x3]
      %s367 = scalar_lea.vmem %s0, 5
      %v368 = vld [vmem:[%s367] ss:$8 sm:$0x3]
      %s369 = scalar_lea.vmem %s0, 6
      %v370 = vld [vmem:[%s369] ss:$8 sm:$0x3]
      %s371 = scalar_lea.vmem %s0, 7
      %v372 = vld [vmem:[%s371] ss:$8 sm:$0x3]
      %s373 = scalar_lea.vmem %s0, 16
      %v374 = vld [vmem:[%s373] ss:$8 sm:$0x3]
      %v375 = vld [vmem:[%s354] sm:$0xff]
      %v376 = vld [vmem:[%s354 + $0x8] sm:$0xff]
      %v377 = vld [vmem:[%s8] sm:$0xff]
      %v378 = vld [vmem:[%s8 + $0x8] sm:$0xff]
      %v379 = vld [vmem:[%s9] sm:$0xff]
      %v380 = vld [vmem:[%s9 + $0x8] sm:$0xff]
      %382 = vset.pattern.permute.xlu0 0
      %383 = vperm.xlu0 %382, %v379
      %v384 = vpop.permute.xlu0 %383
      %387 = vset.pattern.permute.xlu0 0
      %388 = vperm.xlu0 %387, %v380
      %v389 = vpop.permute.xlu0 %388
      %vm391 = vcmask 64512
      %v393 = vsel %vm391, %v377, 0
      %v396 = vsel %vm391, %v378, 0
      %398 = vmatprep.subr.mxu0 %v376
      %399 = vmatpush1.msra.mxu0 %v375
      %400 = vmatprep.subr.mxu0 0.0
      %401 = vmatpush1.msra.mxu0 0.0
      %402 = vmatprep.subr.mxu0 0.0
      %403 = vmatpush1.msra.mxu0 0.0
      %404 = vmatprep.subr.mxu0 0.0
      %405 = vmatpush1.msra.mxu0 0.0
      %406 = vmatprep.subr.mxu0 0.0
      %407 = vmatpush1.msra.mxu0 0.0
      %408 = vmatprep.subr.mxu0 0.0
      %409 = vmatpush1.msra.mxu0 0.0
      %410 = vmatprep.subr.mxu0 0.0
      %411 = vmatpush1.msra.mxu0 0.0
      %412 = vmatprep.subr.mxu0 0.0
      %413 = vmatpush1.msra.mxu0 0.0
      %414 = vmatprep.subr.mxu0 0.0
      %415 = vmatpush1.msra.mxu0 0.0
      %416 = vmatprep.subr.mxu0 0.0
      %417 = vmatpush1.msra.mxu0 0.0
      %418 = vmatprep.subr.mxu0 0.0
      %419 = vmatpush1.msra.mxu0 0.0
      %420 = vmatprep.subr.mxu0 0.0
      %421 = vmatpush1.msra.mxu0 0.0
      %422 = vmatprep.subr.mxu0 0.0
      %423 = vmatpush1.msra.mxu0 0.0
      %424 = vmatprep.subr.mxu0 0.0
      %425 = vmatpush1.msra.mxu0 0.0
      %426 = vmatprep.subr.mxu0 0.0
      %427 = vmatpush1.msra.mxu0 0.0
      %428 = vmatprep.subr.mxu0 0.0
      %429 = vmatpush1.msra.mxu0 0.0
      %430 = vmatprep.subr.mxu0 0.0
      %431 = vmatpush1.msra.mxu0 0.0
      %432 = vmatprep.subr.mxu0 0.0
      %433 = vmatpush1.msra.mxu0 0.0
      %434 = vmatprep.subr.mxu0 0.0
      %435 = vmatpush1.msra.mxu0 0.0
      %436 = vmatprep.subr.mxu0 0.0
      %437 = vmatpush1.msra.mxu0 0.0
      %438 = vmatprep.subr.mxu0 0.0
      %439 = vmatpush1.msra.mxu0 0.0
      %440 = vmatprep.subr.mxu0 0.0
      %441 = vmatpush1.msra.mxu0 0.0
      %442 = vmatprep.subr.mxu0 0.0
      %443 = vmatpush1.msra.mxu0 0.0
      %444 = vmatprep.subr.mxu0 0.0
      %445 = vmatpush1.msra.mxu0 0.0
      %446 = vmatprep.subr.mxu0 0.0
      %447 = vmatpush1.msra.mxu0 0.0
      %448 = vmatprep.subr.mxu0 0.0
      %449 = vmatpush1.msra.mxu0 0.0
      %450 = vmatprep.subr.mxu0 0.0
      %451 = vmatpush1.msra.mxu0 0.0
      %452 = vmatprep.subr.mxu0 0.0
      %453 = vmatpush1.msra.mxu0 0.0
      %454 = vmatprep.subr.mxu0 0.0
      %455 = vmatpush1.msra.mxu0 0.0
      %456 = vmatprep.subr.mxu0 0.0
      %457 = vmatpush1.msra.mxu0 0.0
      %458 = vmatprep.subr.mxu0 0.0
      %459 = vmatpush1.msra.mxu0 0.0
      %460 = vmatprep.subr.mxu0 0.0
      %461 = vmatpush1.msra.mxu0 0.0
      %462 = vmatprep.mubr.f32.mxu0 0.0
      %463 = vmatmul.mubr.f32.gmra.mrb[0].mxu0 %v393
      %v464 = vpop.f32.mrb[0].mxu0
      %v465 = vadd.f32 %v384, %v464
      %v466 = vpop.f32.mrb[0].mxu0
      %v467 = vadd.f32 %v384, %v466
      %468 = vmatprep.mubr.f32.mxu0 0.0
      %469 = vmatmul.mubr.f32.gmra.mrb[0].mxu0 %v396
      %v470 = vpop.f32.mrb[0].mxu0
      %v471 = vadd.f32 %v389, %v470
      %v472 = vpop.f32.mrb[0].mxu0
      %v473 = vadd.f32 %v389, %v472
      %474 = vdwg.mxu0
      %475 = vrot.lane.b32.xlu0 %v375, 17
      %v476 = vpop.permute.xlu0 %475
      %477 = vrot.lane.b32.xlu0 %v376, 17
      %v478 = vpop.permute.xlu0 %477
      %v479 = vlaneseq
      %v480 = vand.u32 %v479, 127
      %vm481 = vcmp.lt.s32.totalorder %v480, 17
      %v482 = vsel %vm481, %v476, %v478
      %v483 = vsel %vm481, %v478, %v476
      %v485 = vlaneseq
      %v486 = vshrl.u32 %v485, 7
      %v487 = vsub.s32 0, %v486
      %v488 = vrot.slane %v360, %v487
      %v489 = vlaneseq
      %v490 = vshrl.u32 %v489, 7
      %v491 = vsub.s32 1, %v490
      %v492 = vrot.slane %v360, %v491
      %v495 = vmul.f32 %v483, %v488
      %v496 = vmul.f32 %v482, %v492
      %497 = vrot.lane.b32.xlu0 %v375, 16
      %v498 = vpop.permute.xlu0 %497
      %499 = vrot.lane.b32.xlu0 %v376, 16
      %v500 = vpop.permute.xlu0 %499
      %vm501 = vcmp.lt.s32.totalorder %v480, 16
      %v502 = vsel %vm501, %v498, %v500
      %v503 = vsel %vm501, %v500, %v498
      %v505 = vlaneseq
      %v506 = vshrl.u32 %v505, 7
      %v507 = vsub.s32 0, %v506
      %v508 = vrot.slane %v362, %v507
      %v509 = vlaneseq
      %v510 = vshrl.u32 %v509, 7
      %v511 = vsub.s32 1, %v510
      %v512 = vrot.slane %v362, %v511
      %v515 = vmul.f32 %v503, %v508
      %v516 = vmul.f32 %v502, %v512
      %517 = vrot.lane.b32.xlu0 %v375, 15
      %v518 = vpop.permute.xlu0 %517
      %519 = vrot.lane.b32.xlu0 %v376, 15
      %v520 = vpop.permute.xlu0 %519
      %vm521 = vcmp.lt.s32.totalorder %v480, 15
      %v522 = vsel %vm521, %v518, %v520
      %v523 = vsel %vm521, %v520, %v518
      %v525 = vlaneseq
      %v526 = vshrl.u32 %v525, 7
      %v527 = vsub.s32 0, %v526
      %v528 = vrot.slane %v364, %v527
      %v529 = vlaneseq
      %v530 = vshrl.u32 %v529, 7
      %v531 = vsub.s32 1, %v530
      %v532 = vrot.slane %v364, %v531
      %v535 = vmul.f32 %v523, %v528
      %v536 = vmul.f32 %v522, %v532
      %537 = vrot.lane.b32.xlu0 %v375, 1
      %v538 = vpop.permute.xlu0 %537
      %539 = vrot.lane.b32.xlu0 %v376, 1
      %v540 = vpop.permute.xlu0 %539
      %vm541 = vcmp.lt.s32.totalorder %v480, 1
      %v542 = vsel %vm541, %v538, %v540
      %v543 = vsel %vm541, %v540, %v538
      %v545 = vlaneseq
      %v546 = vshrl.u32 %v545, 7
      %v547 = vsub.s32 0, %v546
      %v548 = vrot.slane %v366, %v547
      %v549 = vlaneseq
      %v550 = vshrl.u32 %v549, 7
      %v551 = vsub.s32 1, %v550
      %v552 = vrot.slane %v366, %v551
      %v555 = vmul.f32 %v543, %v548
      %v556 = vmul.f32 %v542, %v552
      %557 = vrot.lane.b32.xlu0 %v375, 127
      %v558 = vpop.permute.xlu0 %557
      %559 = vrot.lane.b32.xlu0 %v376, 127
      %v560 = vpop.permute.xlu0 %559
      %vm561 = vcmp.lt.s32.totalorder %v480, 127
      %v562 = vsel %vm561, %v558, %v560
      %v563 = vsel %vm561, %v560, %v558
      %v565 = vlaneseq
      %v566 = vshrl.u32 %v565, 7
      %v567 = vsub.s32 0, %v566
      %v568 = vrot.slane %v368, %v567
      %v569 = vlaneseq
      %v570 = vshrl.u32 %v569, 7
      %v571 = vsub.s32 1, %v570
      %v572 = vrot.slane %v368, %v571
      %v575 = vmul.f32 %v562, %v568
      %v576 = vmul.f32 %v563, %v572
      %577 = vrot.lane.b32.xlu0 %v375, 113
      %v578 = vpop.permute.xlu0 %577
      %579 = vrot.lane.b32.xlu0 %v376, 113
      %v580 = vpop.permute.xlu0 %579
      %vm581 = vcmp.lt.s32.totalorder %v480, 113
      %v582 = vsel %vm581, %v578, %v580
      %v583 = vsel %vm581, %v580, %v578
      %v585 = vlaneseq
      %v586 = vshrl.u32 %v585, 7
      %v587 = vsub.s32 0, %v586
      %v588 = vrot.slane %v370, %v587
      %v589 = vlaneseq
      %v590 = vshrl.u32 %v589, 7
      %v591 = vsub.s32 1, %v590
      %v592 = vrot.slane %v370, %v591
      %v595 = vmul.f32 %v582, %v588
      %v596 = vmul.f32 %v583, %v592
      %597 = vrot.lane.b32.xlu0 %v375, 112
      %v598 = vpop.permute.xlu0 %597
      %599 = vrot.lane.b32.xlu0 %v376, 112
      %v600 = vpop.permute.xlu0 %599
      %vm601 = vcmp.lt.s32.totalorder %v480, 112
      %v602 = vsel %vm601, %v598, %v600
      %v603 = vsel %vm601, %v600, %v598
      %v605 = vlaneseq
      %v606 = vshrl.u32 %v605, 7
      %v607 = vsub.s32 0, %v606
      %v608 = vrot.slane %v372, %v607
      %v609 = vlaneseq
      %v610 = vshrl.u32 %v609, 7
      %v611 = vsub.s32 1, %v610
      %v612 = vrot.slane %v372, %v611
      %v615 = vmul.f32 %v602, %v608
      %v616 = vmul.f32 %v603, %v612
      %617 = vrot.lane.b32.xlu0 %v375, 111
      %v618 = vpop.permute.xlu0 %617
      %619 = vrot.lane.b32.xlu0 %v376, 111
      %v620 = vpop.permute.xlu0 %619
      %vm621 = vcmp.lt.s32.totalorder %v480, 111
      %v622 = vsel %vm621, %v618, %v620
      %v623 = vsel %vm621, %v620, %v618
      %v625 = vlaneseq
      %v626 = vshrl.u32 %v625, 7
      %v627 = vsub.s32 0, %v626
      %v628 = vrot.slane %v374, %v627
      %v629 = vlaneseq
      %v630 = vshrl.u32 %v629, 7
      %v631 = vsub.s32 1, %v630
      %v632 = vrot.slane %v374, %v631
      %v635 = vmul.f32 %v622, %v628
      %v636 = vmul.f32 %v623, %v632
      %v637 = vld [vmem:[%s2] sm:$0xff]
      %v638 = vld [vmem:[%s2 + $0x8] sm:$0xff]
      %v639 = vld [vmem:[%s2 + $0x10] sm:$0xff]
      %v640 = vld [vmem:[%s3] sm:$0xff]
      %v641 = vld [vmem:[%s3 + $0x8] sm:$0xff]
      %v642 = vld [vmem:[%s3 + $0x10] sm:$0xff]
      %644 = vset.pattern.permute.xlu0 0
      %645 = vperm.xlu0 %644, %v640
      %v646 = vpop.permute.xlu0 %645
      %649 = vset.pattern.permute.xlu0 0
      %650 = vperm.xlu0 %649, %v641
      %v651 = vpop.permute.xlu0 %650
      %654 = vset.pattern.permute.xlu0 0
      %655 = vperm.xlu0 %654, %v642
      %v656 = vpop.permute.xlu0 %655
      %vm658 = vcmask 588800
      %v660 = vsel %vm658, %v637, 0
      %v663 = vsel %vm658, %v638, 0
      %v666 = vsel %vm658, %v639, 0
      %668 = vmatprep.subr.mxu0 %v496
      %669 = vmatpush1.msra.mxu0 %v495
      %670 = vmatprep.subr.mxu0 %v516
      %671 = vmatpush1.msra.mxu0 %v515
      %672 = vmatprep.subr.mxu0 %v536
      %673 = vmatpush1.msra.mxu0 %v535
      %674 = vmatprep.subr.mxu0 %v556
      %675 = vmatpush1.msra.mxu0 %v555
      %676 = vmatprep.subr.mxu0 %v376
      %677 = vmatpush1.msra.mxu0 %v375
      %678 = vmatprep.subr.mxu0 %v576
      %679 = vmatpush1.msra.mxu0 %v575
      %680 = vmatprep.subr.mxu0 %v596
      %681 = vmatpush1.msra.mxu0 %v595
      %682 = vmatprep.subr.mxu0 %v616
      %683 = vmatpush1.msra.mxu0 %v615
      %684 = vmatprep.subr.mxu0 %v636
      %685 = vmatpush1.msra.mxu0 %v635
      %686 = vmatprep.subr.mxu0 0.0
      %687 = vmatpush1.msra.mxu0 0.0
      %688 = vmatprep.subr.mxu0 0.0
      %689 = vmatpush1.msra.mxu0 0.0
      %690 = vmatprep.subr.mxu0 0.0
      %691 = vmatpush1.msra.mxu0 0.0
      %692 = vmatprep.subr.mxu0 0.0
      %693 = vmatpush1.msra.mxu0 0.0
      %694 = vmatprep.subr.mxu0 0.0
      %695 = vmatpush1.msra.mxu0 0.0
      %696 = vmatprep.subr.mxu0 0.0
      %697 = vmatpush1.msra.mxu0 0.0
      %698 = vmatprep.subr.mxu0 0.0
      %699 = vmatpush1.msra.mxu0 0.0
      %700 = vmatprep.subr.mxu0 0.0
      %701 = vmatpush1.msra.mxu0 0.0
      %702 = vmatprep.subr.mxu0 0.0
      %703 = vmatpush1.msra.mxu0 0.0
      %704 = vmatprep.subr.mxu0 0.0
      %705 = vmatpush1.msra.mxu0 0.0
      %706 = vmatprep.subr.mxu0 0.0
      %707 = vmatpush1.msra.mxu0 0.0
      %708 = vmatprep.subr.mxu0 0.0
      %709 = vmatpush1.msra.mxu0 0.0
      %710 = vmatprep.subr.mxu0 0.0
      %711 = vmatpush1.msra.mxu0 0.0
      %712 = vmatprep.subr.mxu0 0.0
      %713 = vmatpush1.msra.mxu0 0.0
      %714 = vmatprep.subr.mxu0 0.0
      %715 = vmatpush1.msra.mxu0 0.0
      %716 = vmatprep.subr.mxu0 0.0
      %717 = vmatpush1.msra.mxu0 0.0
      %718 = vmatprep.subr.mxu0 0.0
      %719 = vmatpush1.msra.mxu0 0.0
      %720 = vmatprep.subr.mxu0 0.0
      %721 = vmatpush1.msra.mxu0 0.0
      %722 = vmatprep.subr.mxu0 0.0
      %723 = vmatpush1.msra.mxu0 0.0
      %724 = vmatprep.subr.mxu0 0.0
      %725 = vmatpush1.msra.mxu0 0.0
      %726 = vmatprep.subr.mxu0 0.0
      %727 = vmatpush1.msra.mxu0 0.0
      %728 = vmatprep.subr.mxu0 0.0
      %729 = vmatpush1.msra.mxu0 0.0
      %730 = vmatprep.subr.mxu0 0.0
      %731 = vmatpush1.msra.mxu0 0.0
      %732 = vmatprep.mubr.f32.mxu0 0.0
      %733 = vmatmul.mubr.f32.gmra.mrb[0].mxu0 %v660
      %v734 = vpop.f32.mrb[0].mxu0
      %v735 = vadd.f32 %v646, %v734
      %v736 = vpop.f32.mrb[0].mxu0
      %v737 = vadd.f32 %v646, %v736
      %738 = vmatprep.mubr.f32.mxu0 0.0
      %739 = vmatmul.mubr.f32.gmra.mrb[0].mxu0 %v663
      %v740 = vpop.f32.mrb[0].mxu0
      %v741 = vadd.f32 %v651, %v740
      %v742 = vpop.f32.mrb[0].mxu0
      %v743 = vadd.f32 %v651, %v742
      %744 = vmatprep.mubr.f32.mxu0 0.0
      %745 = vmatmul.mubr.f32.gmra.mrb[0].mxu0 %v666
      %v746 = vpop.f32.mrb[0].mxu0
      %v747 = vadd.f32 %v656, %v746
      %v748 = vpop.f32.mrb[0].mxu0
      %v749 = vadd.f32 %v656, %v748
      %750 = vdwg.mxu0
      %v751 = vadd.f32 %v465, %v741
      %v752 = vadd.f32 %v467, %v743
      %v753 = vadd.f32 %v471, %v747
      %v754 = vadd.f32 %v473, %v749
      %755 = vrot.lane.b32.xlu0 %v735, 17
      %v756 = vpop.permute.xlu0 %755
      %757 = vrot.lane.b32.xlu0 %v737, 17
      %v758 = vpop.permute.xlu0 %757
      %v759 = vsel %vm481, %v756, %v758
      %v760 = vsel %vm481, %v758, %v756
      %v761 = vmul.f32 %v760, %v488
      %v762 = vmul.f32 %v759, %v492
      %763 = vrot.lane.b32.xlu0 %v735, 16
      %v764 = vpop.permute.xlu0 %763
      %765 = vrot.lane.b32.xlu0 %v737, 16
      %v766 = vpop.permute.xlu0 %765
      %v767 = vsel %vm501, %v764, %v766
      %v768 = vsel %vm501, %v766, %v764
      %v769 = vmul.f32 %v768, %v508
      %v770 = vmul.f32 %v767, %v512
      %771 = vrot.lane.b32.xlu0 %v735, 15
      %v772 = vpop.permute.xlu0 %771
      %773 = vrot.lane.b32.xlu0 %v737, 15
      %v774 = vpop.permute.xlu0 %773
      %v775 = vsel %vm521, %v772, %v774
      %v776 = vsel %vm521, %v774, %v772
      %v777 = vmul.f32 %v776, %v528
      %v778 = vmul.f32 %v775, %v532
      %779 = vrot.lane.b32.xlu0 %v735, 1
      %v780 = vpop.permute.xlu0 %779
      %781 = vrot.lane.b32.xlu0 %v737, 1
      %v782 = vpop.permute.xlu0 %781
      %v783 = vsel %vm541, %v780, %v782
      %v784 = vsel %vm541, %v782, %v780
      %v785 = vmul.f32 %v784, %v548
      %v786 = vmul.f32 %v783, %v552
      %787 = vrot.lane.b32.xlu0 %v735, 127
      %v788 = vpop.permute.xlu0 %787
      %789 = vrot.lane.b32.xlu0 %v737, 127
      %v790 = vpop.permute.xlu0 %789
      %v791 = vsel %vm561, %v788, %v790
      %v792 = vsel %vm561, %v790, %v788
      %v793 = vmul.f32 %v791, %v568
      %v794 = vmul.f32 %v792, %v572
      %795 = vrot.lane.b32.xlu0 %v735, 113
      %v796 = vpop.permute.xlu0 %795
      %797 = vrot.lane.b32.xlu0 %v737, 113
      %v798 = vpop.permute.xlu0 %797
      %v799 = vsel %vm581, %v796, %v798
      %v800 = vsel %vm581, %v798, %v796
      %v801 = vmul.f32 %v799, %v588
      %v802 = vmul.f32 %v800, %v592
      %803 = vrot.lane.b32.xlu0 %v735, 112
      %v804 = vpop.permute.xlu0 %803
      %805 = vrot.lane.b32.xlu0 %v737, 112
      %v806 = vpop.permute.xlu0 %805
      %v807 = vsel %vm601, %v804, %v806
      %v808 = vsel %vm601, %v806, %v804
      %v809 = vmul.f32 %v807, %v608
      %v810 = vmul.f32 %v808, %v612
      %811 = vrot.lane.b32.xlu0 %v735, 111
      %v812 = vpop.permute.xlu0 %811
      %813 = vrot.lane.b32.xlu0 %v737, 111
      %v814 = vpop.permute.xlu0 %813
      %v815 = vsel %vm621, %v812, %v814
      %v816 = vsel %vm621, %v814, %v812
      %v817 = vmul.f32 %v815, %v628
      %v818 = vmul.f32 %v816, %v632
      %v819 = vld [vmem:[%s4] sm:$0xff]
      %v820 = vld [vmem:[%s4 + $0x8] sm:$0xff]
      %v821 = vld [vmem:[%s4 + $0x10] sm:$0xff]
      %v822 = vld [vmem:[%s5] sm:$0xff]
      %v823 = vld [vmem:[%s5 + $0x8] sm:$0xff]
      %v824 = vld [vmem:[%s5 + $0x10] sm:$0xff]
      %826 = vset.pattern.permute.xlu0 0
      %827 = vperm.xlu0 %826, %v822
      %v828 = vpop.permute.xlu0 %827
      %831 = vset.pattern.permute.xlu0 0
      %832 = vperm.xlu0 %831, %v823
      %v833 = vpop.permute.xlu0 %832
      %836 = vset.pattern.permute.xlu0 0
      %837 = vperm.xlu0 %836, %v824
      %v838 = vpop.permute.xlu0 %837
      %v841 = vsel %vm658, %v819, 0
      %v844 = vsel %vm658, %v820, 0
      %v847 = vsel %vm658, %v821, 0
      %849 = vmatprep.subr.mxu0 %v762
      %850 = vmatpush1.msra.mxu0 %v761
      %851 = vmatprep.subr.mxu0 %v770
      %852 = vmatpush1.msra.mxu0 %v769
      %853 = vmatprep.subr.mxu0 %v778
      %854 = vmatpush1.msra.mxu0 %v777
      %855 = vmatprep.subr.mxu0 %v786
      %856 = vmatpush1.msra.mxu0 %v785
      %857 = vmatprep.subr.mxu0 %v737
      %858 = vmatpush1.msra.mxu0 %v735
      %859 = vmatprep.subr.mxu0 %v794
      %860 = vmatpush1.msra.mxu0 %v793
      %861 = vmatprep.subr.mxu0 %v802
      %862 = vmatpush1.msra.mxu0 %v801
      %863 = vmatprep.subr.mxu0 %v810
      %864 = vmatpush1.msra.mxu0 %v809
      %865 = vmatprep.subr.mxu0 %v818
      %866 = vmatpush1.msra.mxu0 %v817
      %867 = vmatprep.subr.mxu0 0.0
      %868 = vmatpush1.msra.mxu0 0.0
      %869 = vmatprep.subr.mxu0 0.0
      %870 = vmatpush1.msra.mxu0 0.0
      %871 = vmatprep.subr.mxu0 0.0
      %872 = vmatpush1.msra.mxu0 0.0
      %873 = vmatprep.subr.mxu0 0.0
      %874 = vmatpush1.msra.mxu0 0.0
      %875 = vmatprep.subr.mxu0 0.0
      %876 = vmatpush1.msra.mxu0 0.0
      %877 = vmatprep.subr.mxu0 0.0
      %878 = vmatpush1.msra.mxu0 0.0
      %879 = vmatprep.subr.mxu0 0.0
      %880 = vmatpush1.msra.mxu0 0.0
      %881 = vmatprep.subr.mxu0 0.0
      %882 = vmatpush1.msra.mxu0 0.0
      %883 = vmatprep.subr.mxu0 0.0
      %884 = vmatpush1.msra.mxu0 0.0
      %885 = vmatprep.subr.mxu0 0.0
      %886 = vmatpush1.msra.mxu0 0.0
      %887 = vmatprep.subr.mxu0 0.0
      %888 = vmatpush1.msra.mxu0 0.0
      %889 = vmatprep.subr.mxu0 0.0
      %890 = vmatpush1.msra.mxu0 0.0
      %891 = vmatprep.subr.mxu0 0.0
      %892 = vmatpush1.msra.mxu0 0.0
      %893 = vmatprep.subr.mxu0 0.0
      %894 = vmatpush1.msra.mxu0 0.0
      %895 = vmatprep.subr.mxu0 0.0
      %896 = vmatpush1.msra.mxu0 0.0
      %897 = vmatprep.subr.mxu0 0.0
      %898 = vmatpush1.msra.mxu0 0.0
      %899 = vmatprep.subr.mxu0 0.0
      %900 = vmatpush1.msra.mxu0 0.0
      %901 = vmatprep.subr.mxu0 0.0
      %902 = vmatpush1.msra.mxu0 0.0
      %903 = vmatprep.subr.mxu0 0.0
      %904 = vmatpush1.msra.mxu0 0.0
      %905 = vmatprep.subr.mxu0 0.0
      %906 = vmatpush1.msra.mxu0 0.0
      %907 = vmatprep.subr.mxu0 0.0
      %908 = vmatpush1.msra.mxu0 0.0
      %909 = vmatprep.subr.mxu0 0.0
      %910 = vmatpush1.msra.mxu0 0.0
      %911 = vmatprep.subr.mxu0 0.0
      %912 = vmatpush1.msra.mxu0 0.0
      %913 = vmatprep.mubr.f32.mxu0 0.0
      %914 = vmatmul.mubr.f32.gmra.mrb[0].mxu0 %v841
      %v915 = vpop.f32.mrb[0].mxu0
      %v916 = vadd.f32 %v828, %v915
      %v917 = vpop.f32.mrb[0].mxu0
      %v918 = vadd.f32 %v828, %v917
      %919 = vmatprep.mubr.f32.mxu0 0.0
      %920 = vmatmul.mubr.f32.gmra.mrb[0].mxu0 %v844
      %v921 = vpop.f32.mrb[0].mxu0
      %v922 = vadd.f32 %v833, %v921
      %v923 = vpop.f32.mrb[0].mxu0
      %v924 = vadd.f32 %v833, %v923
      %925 = vmatprep.mubr.f32.mxu0 0.0
      %926 = vmatmul.mubr.f32.gmra.mrb[0].mxu0 %v847
      %v927 = vpop.f32.mrb[0].mxu0
      %v928 = vadd.f32 %v838, %v927
      %v929 = vpop.f32.mrb[0].mxu0
      %v930 = vadd.f32 %v838, %v929
      %931 = vdwg.mxu0
      %v932 = vadd.f32 %v751, %v922
      %v933 = vadd.f32 %v752, %v924
      %v934 = vadd.f32 %v753, %v928
      %v935 = vadd.f32 %v754, %v930
      %936 = vrot.lane.b32.xlu0 %v916, 17
      %v937 = vpop.permute.xlu0 %936
      %938 = vrot.lane.b32.xlu0 %v918, 17
      %v939 = vpop.permute.xlu0 %938
      %v940 = vsel %vm481, %v937, %v939
      %v941 = vsel %vm481, %v939, %v937
      %v942 = vmul.f32 %v941, %v488
      %v943 = vmul.f32 %v940, %v492
      %944 = vrot.lane.b32.xlu0 %v916, 16
      %v945 = vpop.permute.xlu0 %944
      %946 = vrot.lane.b32.xlu0 %v918, 16
      %v947 = vpop.permute.xlu0 %946
      %v948 = vsel %vm501, %v945, %v947
      %v949 = vsel %vm501, %v947, %v945
      %v950 = vmul.f32 %v949, %v508
      %v951 = vmul.f32 %v948, %v512
      %952 = vrot.lane.b32.xlu0 %v916, 15
      %v953 = vpop.permute.xlu0 %952
      %954 = vrot.lane.b32.xlu0 %v918, 15
      %v955 = vpop.permute.xlu0 %954
      %v956 = vsel %vm521, %v953, %v955
      %v957 = vsel %vm521, %v955, %v953
      %v958 = vmul.f32 %v957, %v528
      %v959 = vmul.f32 %v956, %v532
      %960 = vrot.lane.b32.xlu0 %v916, 1
      %v961 = vpop.permute.xlu0 %960
      %962 = vrot.lane.b32.xlu0 %v918, 1
      %v963 = vpop.permute.xlu0 %962
      %v964 = vsel %vm541, %v961, %v963
      %v965 = vsel %vm541, %v963, %v961
      %v966 = vmul.f32 %v965, %v548
      %v967 = vmul.f32 %v964, %v552
      %968 = vrot.lane.b32.xlu0 %v916, 127
      %v969 = vpop.permute.xlu0 %968
      %970 = vrot.lane.b32.xlu0 %v918, 127
      %v971 = vpop.permute.xlu0 %970
      %v972 = vsel %vm561, %v969, %v971
      %v973 = vsel %vm561, %v971, %v969
      %v974 = vmul.f32 %v972, %v568
      %v975 = vmul.f32 %v973, %v572
      %976 = vrot.lane.b32.xlu0 %v916, 113
      %v977 = vpop.permute.xlu0 %976
      %978 = vrot.lane.b32.xlu0 %v918, 113
      %v979 = vpop.permute.xlu0 %978
      %v980 = vsel %vm581, %v977, %v979
      %v981 = vsel %vm581, %v979, %v977
      %v982 = vmul.f32 %v980, %v588
      %v983 = vmul.f32 %v981, %v592
      %984 = vrot.lane.b32.xlu0 %v916, 112
      %v985 = vpop.permute.xlu0 %984
      %986 = vrot.lane.b32.xlu0 %v918, 112
      %v987 = vpop.permute.xlu0 %986
      %v988 = vsel %vm601, %v985, %v987
      %v989 = vsel %vm601, %v987, %v985
      %v990 = vmul.f32 %v988, %v608
      %v991 = vmul.f32 %v989, %v612
      %992 = vrot.lane.b32.xlu0 %v916, 111
      %v993 = vpop.permute.xlu0 %992
      %994 = vrot.lane.b32.xlu0 %v918, 111
      %v995 = vpop.permute.xlu0 %994
      %v996 = vsel %vm621, %v993, %v995
      %v997 = vsel %vm621, %v995, %v993
      %v998 = vmul.f32 %v996, %v628
      %v999 = vmul.f32 %v997, %v632
      %v1000 = vld [vmem:[%s6] sm:$0xff]
      %v1001 = vld [vmem:[%s6 + $0x8] sm:$0xff]
      %v1002 = vld [vmem:[%s7] sm:$0xff]
      %v1003 = vld [vmem:[%s7 + $0x8] sm:$0xff]
      %1005 = vset.pattern.permute.xlu0 0
      %1006 = vperm.xlu0 %1005, %v1002
      %v1007 = vpop.permute.xlu0 %1006
      %1010 = vset.pattern.permute.xlu0 0
      %1011 = vperm.xlu0 %1010, %v1003
      %v1012 = vpop.permute.xlu0 %1011
      %v1015 = vsel %vm658, %v1000, 0
      %v1018 = vsel %vm658, %v1001, 0
      %1020 = vmatprep.subr.mxu0 %v943
      %1021 = vmatpush1.msra.mxu0 %v942
      %1022 = vmatprep.subr.mxu0 %v951
      %1023 = vmatpush1.msra.mxu0 %v950
      %1024 = vmatprep.subr.mxu0 %v959
      %1025 = vmatpush1.msra.mxu0 %v958
      %1026 = vmatprep.subr.mxu0 %v967
      %1027 = vmatpush1.msra.mxu0 %v966
      %1028 = vmatprep.subr.mxu0 %v918
      %1029 = vmatpush1.msra.mxu0 %v916
      %1030 = vmatprep.subr.mxu0 %v975
      %1031 = vmatpush1.msra.mxu0 %v974
      %1032 = vmatprep.subr.mxu0 %v983
      %1033 = vmatpush1.msra.mxu0 %v982
      %1034 = vmatprep.subr.mxu0 %v991
      %1035 = vmatpush1.msra.mxu0 %v990
      %1036 = vmatprep.subr.mxu0 %v999
      %1037 = vmatpush1.msra.mxu0 %v998
      %1038 = vmatprep.subr.mxu0 0.0
      %1039 = vmatpush1.msra.mxu0 0.0
      %1040 = vmatprep.subr.mxu0 0.0
      %1041 = vmatpush1.msra.mxu0 0.0
      %1042 = vmatprep.subr.mxu0 0.0
      %1043 = vmatpush1.msra.mxu0 0.0
      %1044 = vmatprep.subr.mxu0 0.0
      %1045 = vmatpush1.msra.mxu0 0.0
      %1046 = vmatprep.subr.mxu0 0.0
      %1047 = vmatpush1.msra.mxu0 0.0
      %1048 = vmatprep.subr.mxu0 0.0
      %1049 = vmatpush1.msra.mxu0 0.0
      %1050 = vmatprep.subr.mxu0 0.0
      %1051 = vmatpush1.msra.mxu0 0.0
      %1052 = vmatprep.subr.mxu0 0.0
      %1053 = vmatpush1.msra.mxu0 0.0
      %1054 = vmatprep.subr.mxu0 0.0
      %1055 = vmatpush1.msra.mxu0 0.0
      %1056 = vmatprep.subr.mxu0 0.0
      %1057 = vmatpush1.msra.mxu0 0.0
      %1058 = vmatprep.subr.mxu0 0.0
      %1059 = vmatpush1.msra.mxu0 0.0
      %1060 = vmatprep.subr.mxu0 0.0
      %1061 = vmatpush1.msra.mxu0 0.0
      %1062 = vmatprep.subr.mxu0 0.0
      %1063 = vmatpush1.msra.mxu0 0.0
      %1064 = vmatprep.subr.mxu0 0.0
      %1065 = vmatpush1.msra.mxu0 0.0
      %1066 = vmatprep.subr.mxu0 0.0
      %1067 = vmatpush1.msra.mxu0 0.0
      %1068 = vmatprep.subr.mxu0 0.0
      %1069 = vmatpush1.msra.mxu0 0.0
      %1070 = vmatprep.subr.mxu0 0.0
      %1071 = vmatpush1.msra.mxu0 0.0
      %1072 = vmatprep.subr.mxu0 0.0
      %1073 = vmatpush1.msra.mxu0 0.0
      %1074 = vmatprep.subr.mxu0 0.0
      %1075 = vmatpush1.msra.mxu0 0.0
      %1076 = vmatprep.subr.mxu0 0.0
      %1077 = vmatpush1.msra.mxu0 0.0
      %1078 = vmatprep.subr.mxu0 0.0
      %1079 = vmatpush1.msra.mxu0 0.0
      %1080 = vmatprep.subr.mxu0 0.0
      %1081 = vmatpush1.msra.mxu0 0.0
      %1082 = vmatprep.subr.mxu0 0.0
      %1083 = vmatpush1.msra.mxu0 0.0
      %1084 = vmatprep.mubr.f32.mxu0 0.0
      %1085 = vmatmul.mubr.f32.gmra.mrb[0].mxu0 %v1015
      %v1086 = vpop.f32.mrb[0].mxu0
      %v1087 = vadd.f32 %v1007, %v1086
      %v1088 = vpop.f32.mrb[0].mxu0
      %v1089 = vadd.f32 %v1007, %v1088
      %1090 = vmatprep.mubr.f32.mxu0 0.0
      %1091 = vmatmul.mubr.f32.gmra.mrb[0].mxu0 %v1018
      %v1092 = vpop.f32.mrb[0].mxu0
      %v1093 = vadd.f32 %v1012, %v1092
      %v1094 = vpop.f32.mrb[0].mxu0
      %v1095 = vadd.f32 %v1012, %v1094
      %1096 = vdwg.mxu0
      %v1097 = vadd.f32 %v932, %v1087
      %v1098 = vadd.f32 %v933, %v1089
      %v1099 = vadd.f32 %v934, %v1093
      %v1100 = vadd.f32 %v935, %v1095
      %1101 = vst [vmem:[%s359] sm:$0xff] %v1097
      %1102 = vst [vmem:[%s359 + $0x8] sm:$0xff] %v1098
      %1103 = vst [vmem:[%s359 + $0x10] sm:$0xff] %v1099
      %1104 = vst [vmem:[%s359 + $0x18] sm:$0xff] %v1100
      %p1105 = scmp.lt.s32.totalorder %s21, 1
      %s1106 = scalar_select %p1105, %s21, 1
      %s1107 = smul.addr %s1106, 4
      %s1108 = smul.addr %s1107, 8
      %s1109 = scalar_lea.vmem %s10, %s1108
      // Predicated region
      $region61: #{multires_block.1} parent=59 // pred_check
        %p1110 = pneg %p254
      $region62: #{multires_block.1} parent=59 // pred_check_branch
        %1112 = sbr.rel (%p1110) target = $region64
      $region63: #{multires_block.1} parent=59 // pred_region
        _
      $region64: #{multires_block.1} parent=59 // pred_fallthru
        _
    $region60: #{multires_block.1} parent=5 // pred_fallthru
      _
    %p1113 = scmp.le.s32.totalorder 2, %s16
    // Predicated region
    $region65: #{multires_block.1} parent=5 // pred_check
      %p1114 = pneg %p1113
    $region66: #{multires_block.1} parent=5 // pred_check_branch
      %1116 = sbr.rel (%p1114) target = $region68
    $region67: #{multires_block.1} parent=5 // pred_region
      %s1117 = ssub.s32 %s16, 2
      // Predicated region
      $region69: #{multires_block.1} parent=67 // pred_check
        %p1118 = pneg %p260
      $region70: #{multires_block.1} parent=67 // pred_check_branch
        %1120 = sbr.rel (%p1118) target = $region72
      $region71: #{multires_block.1} parent=67 // pred_region
        %p1121 = scmp.lt.s32.totalorder %s22, 1
        %s1122 = scalar_select %p1121, %s22, 1
        %s1123 = smul.addr %s1122, 4
        %s1124 = smul.addr %s1123, 8
        %s1125 = scalar_lea.vmem %s10, %s1124
      $region72: #{multires_block.1} parent=67 // pred_fallthru
        _
    $region68: #{multires_block.1} parent=5 // pred_fallthru
      _
  $region6: #{multires_block.1} parent=0 // loop_footer
    %s20 = sadd.s32 1, %s16
  $region7: #{multires_block.1} parent=0 // loop_footer_branch
    %15 = sbr.rel target = $region3
  $region8: #{multires_block.1} parent=0 // loop_exit
    _

</llo_original>
